<compile_context>
chip_gen: v5e
topology: v5e:2x2
jax: 0.10.0
libtpu: 0.0.40
codegen_flags: <defaults>
</compile_context>

<pallas_src>
import jax
import jax.numpy as jnp
from jax import lax
from jax.experimental import pallas as pl
from jax.experimental.pallas import tpu as pltpu


def _round_up(x, m):
    return ((x + m - 1) // m) * m


def _tpu_generation():
    try:
        kind = jax.devices()[0].device_kind.lower()
    except Exception:
        return "unknown"
    if "v5e" in kind or "v5 lite" in kind or "v5lite" in kind:
        return "v5e"
    if "v6" in kind:
        return "v6e"
    if "v7" in kind:
        return "v7x"
    return "unknown"


def _vmem_limit_bytes():
    """~85% of physical per-core VMEM (48-56 MiB on v7x, ~108 MiB on v5e/v6e)."""
    try:
        cap = int(pltpu.get_tpu_info().vmem_capacity_bytes)
    except Exception:
        cap = (64 if _tpu_generation() == "v7x" else 128) * 1024 * 1024
    return int(cap * 0.85)


# ----------------------------------------------------------------------------
# Kernels
# ----------------------------------------------------------------------------
def mlp_resident_kernel(x_ref, w_in_ref, b_in_ref, w_h_ref, b_h_ref,
                        w_out_ref, b_out_ref, out_ref, h_ref):
    """One batch tile: the whole MLP in a single grid step (weights resident).

    h_ref: (TM, H) bf16 VMEM scratch holding the carried activations.
    """
    # Input layer: h = relu(x @ W_in + b_in)   (bias+ReLU in f32, store bf16).
    h0 = jnp.dot(x_ref[...], w_in_ref[...], preferred_element_type=jnp.float32)
    h_ref[...] = jnp.maximum(h0 + b_in_ref[...], 0.0).astype(h_ref.dtype)

    n_layers = w_h_ref.shape[0]

    # Hidden layers (Dropout p=0 / eval => identity, omitted).
    def body(l, carry):
        h = jnp.dot(h_ref[...], w_h_ref[l], preferred_element_type=jnp.float32)
        h_ref[...] = jnp.maximum(h + b_h_ref[l], 0.0).astype(h_ref.dtype)
        return carry

    lax.fori_loop(0, n_layers, body, 0, unroll=True)

    # Output layer, lane-padded to N=128 -> dense unmasked store.
    logits = jnp.dot(h_ref[...], w_out_ref[...], preferred_element_type=jnp.float32)
    out_ref[...] = logits + b_out_ref[...]


def mlp_stream_kernel(x_ref, w_in_ref, b_in_ref, w_h_ref, b_h_ref,
                      w_out_ref, b_out_ref, out_ref, h_ref):
    """One (batch-tile, layer) grid step: hidden weights streamed per layer."""
    layer = pl.program_id(1)
    n_layers = pl.num_programs(1)

    @pl.when(layer == 0)
    def _():
        h0 = jnp.dot(x_ref[...], w_in_ref[...], preferred_element_type=jnp.float32)
        h_ref[...] = jnp.maximum(h0 + b_in_ref[...], 0.0).astype(h_ref.dtype)

    # Hidden layer `layer` (biases are resident, indexed dynamically).
    h = jnp.dot(h_ref[...], w_h_ref[0], preferred_element_type=jnp.float32)
    h_ref[...] = jnp.maximum(h + b_h_ref[layer], 0.0).astype(h_ref.dtype)

    @pl.when(layer == n_layers - 1)
    def _():
        logits = jnp.dot(h_ref[...], w_out_ref[...],
                         preferred_element_type=jnp.float32)
        out_ref[...] = logits + b_out_ref[...]


# ----------------------------------------------------------------------------
# Wrapper
# ----------------------------------------------------------------------------
def neural_network_forward(x, params, *, tile_m=None):
    """Fused Pallas forward matching NeuralNetwork.forward (f32 logits, squeezed)."""
    w_in, b_in, w_h, b_h, w_out, b_out = params
    batch, input_size = x.shape
    hidden = w_in.shape[1]
    n_layers = w_h.shape[0]
    output_size = w_out.shape[1]
    assert n_layers >= 1, "n_linear_layers must be >= 1"
    assert output_size <= 128

    gen = _tpu_generation()
    vmem_limit = _vmem_limit_bytes()
    budget = int(vmem_limit * 0.7)  # headroom for compiler-internal scratch

    # ---- Pad to MXU / lane-friendly shapes (zero padding is exact) ----
    k_pad = _round_up(max(input_size, 128), 128)
    h_pad = _round_up(max(hidden, 128), 128)  # sub-128 hidden is lane-starved
    n_pad = 128                               # lane-dense output slab

    # Choose plan: keep all hidden weights resident whenever they fit.
    weight_bytes_resident = (2 * (n_layers * h_pad * h_pad + k_pad * h_pad
                                  + h_pad * n_pad)
                             + 4 * ((n_layers + 1) * h_pad + n_pad))
    resident = weight_bytes_resident <= int(vmem_limit * 0.6)

    # ---- Generation-aware batch tile (review: TM must exceed HBM/MXU
    # break-even when streaming; for the resident plan a moderate TM suffices).
    if tile_m is None:
        if resident:
            tile_m = 512
        else:
            tile_m = {"v5e": 256, "v6e": 768, "v7x": 384}.get(gen, 512)
    tile_m = max(128, min(_round_up(tile_m, 128), _round_up(batch, 128)))

    def act_bytes(tm):
        # x (2 bufs, bf16) + out (2 bufs, f32) + bf16 activation scratch
        return tm * (2 * k_pad * 2 + 2 * n_pad * 4 + h_pad * 2)

    if resident:
        fixed_bytes = weight_bytes_resident
        w_h_bufs = 1
    else:
        w_h_bufs = 3 if (3 * h_pad * h_pad * 2 + act_bytes(tile_m)) <= budget else 2
        fixed_bytes = ((w_h_bufs * h_pad * h_pad + k_pad * h_pad + h_pad * n_pad) * 2
                       + 4 * ((n_layers + 1) * h_pad + n_pad))
    while tile_m > 128 and fixed_bytes + act_bytes(tile_m) > budget:
        tile_m -= 128

    m_pad = _round_up(batch, tile_m)
    grid_m = m_pad // tile_m

    # ---- Cast / pad operands ----
    x_p = jnp.zeros((m_pad, k_pad), jnp.bfloat16).at[:batch, :input_size].set(
        x.astype(jnp.bfloat16))
    w_in_p = jnp.zeros((k_pad, h_pad), jnp.bfloat16).at[:input_size, :hidden].set(
        w_in.astype(jnp.bfloat16))
    b_in_p = jnp.zeros((1, h_pad), jnp.float32).at[:, :hidden].set(
        b_in.astype(jnp.float32))
    w_h_p = jnp.zeros((n_layers, h_pad, h_pad), jnp.bfloat16).at[
        :, :hidden, :hidden].set(w_h.astype(jnp.bfloat16))
    b_h_p = jnp.zeros((n_layers, 1, h_pad), jnp.float32).at[:, :, :hidden].set(
        b_h.astype(jnp.float32))
    w_out_p = jnp.zeros((h_pad, n_pad), jnp.bfloat16).at[:hidden, :output_size].set(
        w_out.astype(jnp.bfloat16))
    b_out_p = jnp.zeros((1, n_pad), jnp.float32).at[:, :output_size].set(
        b_out.astype(jnp.float32))

    single_buf = pl.Buffered(1)  # block-index-invariant operands: no 2nd buffer

    flops = 2 * m_pad * (k_pad * h_pad + n_layers * h_pad * h_pad + h_pad * n_pad)
    weight_once = ((w_in_p.size + w_out_p.size) * 2
                   + (b_in_p.size + b_h_p.size + b_out_p.size) * 4)
    io_bytes = x_p.size * 2 + m_pad * n_pad * 4

    if resident:
        grid = (grid_m,)
        in_specs = [
            pl.BlockSpec((tile_m, k_pad), lambda i: (i, 0)),
            pl.BlockSpec((k_pad, h_pad), lambda i: (0, 0), pipeline_mode=single_buf),
            pl.BlockSpec((1, h_pad), lambda i: (0, 0), pipeline_mode=single_buf),
            pl.BlockSpec((n_layers, h_pad, h_pad), lambda i: (0, 0, 0),
                         pipeline_mode=single_buf),
            pl.BlockSpec((n_layers, 1, h_pad), lambda i: (0, 0, 0),
                         pipeline_mode=single_buf),
            pl.BlockSpec((h_pad, n_pad), lambda i: (0, 0), pipeline_mode=single_buf),
            pl.BlockSpec((1, n_pad), lambda i: (0, 0), pipeline_mode=single_buf),
        ]
        out_specs = pl.BlockSpec((tile_m, n_pad), lambda i: (i, 0))
        dim_sem = ("parallel",)
        kernel = mlp_resident_kernel
        bytes_accessed = io_bytes + weight_once + w_h_p.size * 2
    else:
        grid = (grid_m, n_layers)
        in_specs = [
            pl.BlockSpec((tile_m, k_pad), lambda i, l: (i, 0)),
            pl.BlockSpec((k_pad, h_pad), lambda i, l: (0, 0), pipeline_mode=single_buf),
            pl.BlockSpec((1, h_pad), lambda i, l: (0, 0), pipeline_mode=single_buf),
            pl.BlockSpec((1, h_pad, h_pad), lambda i, l: (l, 0, 0),
                         pipeline_mode=pl.Buffered(w_h_bufs)),
            pl.BlockSpec((n_layers, 1, h_pad), lambda i, l: (0, 0, 0),
                         pipeline_mode=single_buf),
            pl.BlockSpec((h_pad, n_pad), lambda i, l: (0, 0), pipeline_mode=single_buf),
            pl.BlockSpec((1, n_pad), lambda i, l: (0, 0), pipeline_mode=single_buf),
        ]
        out_specs = pl.BlockSpec((tile_m, n_pad), lambda i, l: (i, 0))
        dim_sem = ("parallel", "arbitrary")
        kernel = mlp_stream_kernel
        # w_h is re-fetched once per batch tile in the streaming plan.
        bytes_accessed = io_bytes + weight_once + grid_m * w_h_p.size * 2

    out = pl.pallas_call(
        kernel,
        out_shape=jax.ShapeDtypeStruct((m_pad, n_pad), jnp.float32),
        grid_spec=pltpu.PrefetchScalarGridSpec(
            num_scalar_prefetch=0,
            grid=grid,
            in_specs=in_specs,
            out_specs=out_specs,
            scratch_shapes=[pltpu.VMEM((tile_m, h_pad), jnp.bfloat16)],
        ),
        compiler_params=pltpu.CompilerParams(
            dimension_semantics=dim_sem,
            vmem_limit_bytes=vmem_limit,
        ),
        cost_estimate=pl.CostEstimate(
            flops=flops, transcendentals=0, bytes_accessed=bytes_accessed),
    )(x_p, w_in_p, b_in_p, w_h_p, b_h_p, w_out_p, b_out_p)

    # Un-pad + PyTorch-style .squeeze() (output_size == 1 -> (batch,)).
    return jnp.squeeze(out[:batch, :output_size])


# ----------------------------------------------------------------------------
# Parameters + pure-JAX reference
# ----------------------------------------------------------------------------
def init_params(key, input_size, hidden_size, n_linear_layers, output_size):
    """Synthetic parameters following NeuralNetwork.__init__ (weights stored (in, out))."""
    ks = jax.random.split(key, 6)
    w_in = jax.random.normal(ks[0], (input_size, hidden_size), jnp.float32) * 0.1
    b_in = jax.random.normal(ks[1], (1, hidden_size), jnp.float32) * 0.1
    w_h = jax.random.normal(ks[2], (n_linear_layers, hidden_size, hidden_size),
                            jnp.float32) * 0.1
    b_h = jax.random.normal(ks[3], (n_linear_layers, 1, hidden_size),
                            jnp.float32) * 0.1
    w_out = jax.random.normal(ks[4], (hidden_size, output_size), jnp.float32) * 0.1
    b_out = jax.random.normal(ks[5], (1, output_size), jnp.float32) * 0.1
    return w_in, b_in, w_h, b_h, w_out, b_out


def reference_forward(x, params):
    """Plain-JAX f32 reference matching the PyTorch forward semantics."""
    w_in, b_in, w_h, b_h, w_out, b_out = params
    h = jnp.maximum(x @ w_in + b_in, 0.0)
    for l in range(w_h.shape[0]):
        h = jnp.maximum(h @ w_h[l] + b_h[l], 0.0)
    return jnp.squeeze(h @ w_out + b_out)


if __name__ == "__main__":
    batch = 8
    input_size = 16
    hidden_size = 64
    n_linear_layers = 2
    output_size = 1

    key = jax.random.PRNGKey(0)
    k_x, k_p = jax.random.split(key)
    x = jax.random.normal(k_x, (batch, input_size), jnp.float32)
    params = init_params(k_p, input_size, hidden_size, n_linear_layers, output_size)

    logits = neural_network_forward(x, params)
    logits = jax.block_until_ready(logits)

    ref = reference_forward(x, params)
    assert logits.shape == (batch,), logits.shape
    # bf16 MXU inputs + bf16 activation carry, f32 accumulation -> loose tol vs f32 ref.
    assert jnp.allclose(logits, ref, atol=3e-2, rtol=3e-2), (logits, ref)

    print("KERNEL_OK")
</pallas_src>

<mosaic_0001>
module attributes {stable_mosaic.version = 11 : i64} {
  func.func @mlp_resident_kernel(%arg0: i32, %arg1: memref<128x128xbf16, #tpu.memory_space<vmem>>, %arg2: memref<128x128xbf16, #tpu.memory_space<vmem>>, %arg3: memref<1x128xf32, #tpu.memory_space<vmem>>, %arg4: memref<2x128x128xbf16, #tpu.memory_space<vmem>>, %arg5: memref<2x1x128xf32, #tpu.memory_space<vmem>>, %arg6: memref<128x128xbf16, #tpu.memory_space<vmem>>, %arg7: memref<1x128xf32, #tpu.memory_space<vmem>>, %arg8: memref<128x128xf32, #tpu.memory_space<vmem>>, %arg9: memref<128x128xbf16, #tpu.memory_space<vmem>>) attributes {dimension_semantics = [#tpu.dimension_semantics<parallel>], iteration_bounds = array<i64: 1>, scalar_prefetch = 0 : i64, scratch_operands = 1 : i64, tpu.core_type = #tpu.core_type<tc>, window_params = [{transform_indices = @transform_0, window_bounds = array<i64: 128, 128>}, {pipeline_mode = #tpu.pipeline_mode<synchronous>, transform_indices = @transform_1, window_bounds = array<i64: 128, 128>}, {pipeline_mode = #tpu.pipeline_mode<synchronous>, transform_indices = @transform_2, window_bounds = array<i64: 1, 128>}, {pipeline_mode = #tpu.pipeline_mode<synchronous>, transform_indices = @transform_3, window_bounds = array<i64: 2, 128, 128>}, {pipeline_mode = #tpu.pipeline_mode<synchronous>, transform_indices = @transform_4, window_bounds = array<i64: 2, 1, 128>}, {pipeline_mode = #tpu.pipeline_mode<synchronous>, transform_indices = @transform_5, window_bounds = array<i64: 128, 128>}, {pipeline_mode = #tpu.pipeline_mode<synchronous>, transform_indices = @transform_6, window_bounds = array<i64: 1, 128>}, {transform_indices = @transform_7, window_bounds = array<i64: 128, 128>}]} {
    %c0 = arith.constant 0 : index
    %c0_0 = arith.constant 0 : index
    %0 = vector.load %arg1[%c0, %c0_0] : memref<128x128xbf16, #tpu.memory_space<vmem>>, vector<128x128xbf16>
    %c0_1 = arith.constant 0 : index
    %c0_2 = arith.constant 0 : index
    %1 = vector.load %arg2[%c0_1, %c0_2] : memref<128x128xbf16, #tpu.memory_space<vmem>>, vector<128x128xbf16>
    %cst = arith.constant dense<0.000000e+00> : vector<128x128xf32>
    %2 = tpu.matmul %0, %1, %cst {dimension_numbers = #tpu.dot_dimension_numbers<[1], [0], [0], [1], [0, 0, 1, 1], [], []>} : vector<128x128xbf16>, vector<128x128xbf16>, vector<128x128xf32> -> vector<128x128xf32>
    %c0_3 = arith.constant 0 : index
    %c0_4 = arith.constant 0 : index
    %3 = vector.load %arg3[%c0_3, %c0_4] : memref<1x128xf32, #tpu.memory_space<vmem>>, vector<1x128xf32>
    %4 = vector.broadcast %3 : vector<1x128xf32> to vector<128x128xf32>
    %5 = arith.addf %2, %4 : vector<128x128xf32>
    %cst_5 = arith.constant 0.000000e+00 : f32
    %6 = vector.broadcast %cst_5 : f32 to vector<128x128xf32>
    %7 = arith.maximumf %5, %6 : vector<128x128xf32>
    %8 = arith.truncf %7 : vector<128x128xf32> to vector<128x128xbf16>
    %c0_6 = arith.constant 0 : index
    %c0_7 = arith.constant 0 : index
    %9 = vector.load %arg9[%c0_6, %c0_7] : memref<128x128xbf16, #tpu.memory_space<vmem>>, vector<128x128xbf16>
    tpu.vector_store %arg9[%c0_6, %c0_7], %8 {strides = array<i32>} : memref<128x128xbf16, #tpu.memory_space<vmem>>, vector<128x128xbf16>,
    %c0_i32 = arith.constant 0 : i32
    %c0_8 = arith.constant 0 : index
    %c0_9 = arith.constant 0 : index
    %10 = vector.load %arg9[%c0_8, %c0_9] : memref<128x128xbf16, #tpu.memory_space<vmem>>, vector<128x128xbf16>
    %11 = arith.index_cast %c0_i32 : i32 to index
    %c0_10 = arith.constant 0 : index
    %c0_11 = arith.constant 0 : index
    %12 = vector.load %arg4[%11, %c0_10, %c0_11] : memref<2x128x128xbf16, #tpu.memory_space<vmem>>, vector<1x128x128xbf16>
    %13 = vector.shape_cast %12 : vector<1x128x128xbf16> to vector<128x128xbf16>
    %cst_12 = arith.constant dense<0.000000e+00> : vector<128x128xf32>
    %14 = tpu.matmul %10, %13, %cst_12 {dimension_numbers = #tpu.dot_dimension_numbers<[1], [0], [0], [1], [0, 0, 1, 1], [], []>} : vector<128x128xbf16>, vector<128x128xbf16>, vector<128x128xf32> -> vector<128x128xf32>
    %15 = arith.index_cast %c0_i32 : i32 to index
    %c0_13 = arith.constant 0 : index
    %c0_14 = arith.constant 0 : index
    %16 = vector.load %arg5[%15, %c0_13, %c0_14] : memref<2x1x128xf32, #tpu.memory_space<vmem>>, vector<1x1x128xf32>
    %17 = vector.shape_cast %16 : vector<1x1x128xf32> to vector<1x128xf32>
    %18 = vector.broadcast %17 : vector<1x128xf32> to vector<128x128xf32>
    %19 = arith.addf %14, %18 : vector<128x128xf32>
    %cst_15 = arith.constant 0.000000e+00 : f32
    %20 = vector.broadcast %cst_15 : f32 to vector<128x128xf32>
    %21 = arith.maximumf %19, %20 : vector<128x128xf32>
    %22 = arith.truncf %21 : vector<128x128xf32> to vector<128x128xbf16>
    %c0_16 = arith.constant 0 : index
    %c0_17 = arith.constant 0 : index
    %23 = vector.load %arg9[%c0_16, %c0_17] : memref<128x128xbf16, #tpu.memory_space<vmem>>, vector<128x128xbf16>
    tpu.vector_store %arg9[%c0_16, %c0_17], %22 {strides = array<i32>} : memref<128x128xbf16, #tpu.memory_space<vmem>>, vector<128x128xbf16>,
    %c1_i32 = arith.constant 1 : i32
    %c0_18 = arith.constant 0 : index
    %c0_19 = arith.constant 0 : index
    %24 = vector.load %arg9[%c0_18, %c0_19] : memref<128x128xbf16, #tpu.memory_space<vmem>>, vector<128x128xbf16>
    %25 = arith.index_cast %c1_i32 : i32 to index
    %c0_20 = arith.constant 0 : index
    %c0_21 = arith.constant 0 : index
    %26 = vector.load %arg4[%25, %c0_20, %c0_21] : memref<2x128x128xbf16, #tpu.memory_space<vmem>>, vector<1x128x128xbf16>
    %27 = vector.shape_cast %26 : vector<1x128x128xbf16> to vector<128x128xbf16>
    %cst_22 = arith.constant dense<0.000000e+00> : vector<128x128xf32>
    %28 = tpu.matmul %24, %27, %cst_22 {dimension_numbers = #tpu.dot_dimension_numbers<[1], [0], [0], [1], [0, 0, 1, 1], [], []>} : vector<128x128xbf16>, vector<128x128xbf16>, vector<128x128xf32> -> vector<128x128xf32>
    %29 = arith.index_cast %c1_i32 : i32 to index
    %c0_23 = arith.constant 0 : index
    %c0_24 = arith.constant 0 : index
    %30 = vector.load %arg5[%29, %c0_23, %c0_24] : memref<2x1x128xf32, #tpu.memory_space<vmem>>, vector<1x1x128xf32>
    %31 = vector.shape_cast %30 : vector<1x1x128xf32> to vector<1x128xf32>
    %32 = vector.broadcast %31 : vector<1x128xf32> to vector<128x128xf32>
    %33 = arith.addf %28, %32 : vector<128x128xf32>
    %cst_25 = arith.constant 0.000000e+00 : f32
    %34 = vector.broadcast %cst_25 : f32 to vector<128x128xf32>
    %35 = arith.maximumf %33, %34 : vector<128x128xf32>
    %36 = arith.truncf %35 : vector<128x128xf32> to vector<128x128xbf16>
    %c0_26 = arith.constant 0 : index
    %c0_27 = arith.constant 0 : index
    %37 = vector.load %arg9[%c0_26, %c0_27] : memref<128x128xbf16, #tpu.memory_space<vmem>>, vector<128x128xbf16>
    tpu.vector_store %arg9[%c0_26, %c0_27], %36 {strides = array<i32>} : memref<128x128xbf16, #tpu.memory_space<vmem>>, vector<128x128xbf16>,
    %c2_i32 = arith.constant 2 : i32
    %c0_28 = arith.constant 0 : index
    %c0_29 = arith.constant 0 : index
    %38 = vector.load %arg9[%c0_28, %c0_29] : memref<128x128xbf16, #tpu.memory_space<vmem>>, vector<128x128xbf16>
    %c0_30 = arith.constant 0 : index
    %c0_31 = arith.constant 0 : index
    %39 = vector.load %arg6[%c0_30, %c0_31] : memref<128x128xbf16, #tpu.memory_space<vmem>>, vector<128x128xbf16>
    %cst_32 = arith.constant dense<0.000000e+00> : vector<128x128xf32>
    %40 = tpu.matmul %38, %39, %cst_32 {dimension_numbers = #tpu.dot_dimension_numbers<[1], [0], [0], [1], [0, 0, 1, 1], [], []>} : vector<128x128xbf16>, vector<128x128xbf16>, vector<128x128xf32> -> vector<128x128xf32>
    %c0_33 = arith.constant 0 : index
    %c0_34 = arith.constant 0 : index
    %41 = vector.load %arg7[%c0_33, %c0_34] : memref<1x128xf32, #tpu.memory_space<vmem>>, vector<1x128xf32>
    %42 = vector.broadcast %41 : vector<1x128xf32> to vector<128x128xf32>
    %43 = arith.addf %40, %42 : vector<128x128xf32>
    %c0_35 = arith.constant 0 : index
    %c0_36 = arith.constant 0 : index
    %44 = vector.load %arg8[%c0_35, %c0_36] : memref<128x128xf32, #tpu.memory_space<vmem>>, vector<128x128xf32>
    tpu.vector_store %arg8[%c0_35, %c0_36], %43 {strides = array<i32>} : memref<128x128xf32, #tpu.memory_space<vmem>>, vector<128x128xf32>,
    return
  }
  func.func @transform_0(%arg0: i32) -> (i32, i32) {
    %c0_i32 = arith.constant 0 : i32
    %c0_i32_0 = arith.constant 0 : i32
    return %arg0, %c0_i32 : i32, i32
  }
  func.func @transform_1(%arg0: i32) -> (i32, i32) {
    %c0_i32 = arith.constant 0 : i32
    %c0_i32_0 = arith.constant 0 : i32
    %c0_i32_1 = arith.constant 0 : i32
    return %c0_i32, %c0_i32_0 : i32, i32
  }
  func.func @transform_2(%arg0: i32) -> (i32, i32) {
    %c0_i32 = arith.constant 0 : i32
    %c0_i32_0 = arith.constant 0 : i32
    %c0_i32_1 = arith.constant 0 : i32
    return %c0_i32, %c0_i32_0 : i32, i32
  }
  func.func @transform_3(%arg0: i32) -> (i32, i32, i32) {
    %c0_i32 = arith.constant 0 : i32
    %c0_i32_0 = arith.constant 0 : i32
    %c0_i32_1 = arith.constant 0 : i32
    %c0_i32_2 = arith.constant 0 : i32
    return %c0_i32, %c0_i32_0, %c0_i32_1 : i32, i32, i32
  }
  func.func @transform_4(%arg0: i32) -> (i32, i32, i32) {
    %c0_i32 = arith.constant 0 : i32
    %c0_i32_0 = arith.constant 0 : i32
    %c0_i32_1 = arith.constant 0 : i32
    %c0_i32_2 = arith.constant 0 : i32
    return %c0_i32, %c0_i32_0, %c0_i32_1 : i32, i32, i32
  }
  func.func @transform_5(%arg0: i32) -> (i32, i32) {
    %c0_i32 = arith.constant 0 : i32
    %c0_i32_0 = arith.constant 0 : i32
    %c0_i32_1 = arith.constant 0 : i32
    return %c0_i32, %c0_i32_0 : i32, i32
  }
  func.func @transform_6(%arg0: i32) -> (i32, i32) {
    %c0_i32 = arith.constant 0 : i32
    %c0_i32_0 = arith.constant 0 : i32
    %c0_i32_1 = arith.constant 0 : i32
    return %c0_i32, %c0_i32_0 : i32, i32
  }
  func.func @transform_7(%arg0: i32) -> (i32, i32) {
    %c0_i32 = arith.constant 0 : i32
    %c0_i32_0 = arith.constant 0 : i32
    return %arg0, %c0_i32 : i32, i32
  }
}

</mosaic_0001>

<llo_original>
// kernel: tpu_custom_call.1
$region0: #{tpu_custom_call.1}
  #allocation0 [shape = 'u32[]', space=smem, size = 0x4, offset = 0x4, fixed_abs, tag = 'smem constant byte address 0x4 - core index']
  #allocation1 [shape = 'u32[72,128]{1,0:T(1,128)}', space=vmem, size = 0x9000, scoped, tag = 'internal scratch']
  #allocation2 [shape = 'bf16[128,128]{1,0:T(8,128)(2,1)}', space=vmem, size = 0x8000, scoped, tag = 'scratch operand']
  %s0 = inlined_call_operand.hbm [shape: bf16[128,128], index: 0, kind: input, shape index: {}]
  %s1 = inlined_call_operand.hbm [shape: bf16[128,128], index: 1, kind: input, shape index: {}]
  %s2 = inlined_call_operand.vmem [shape: f32[1,128], index: 2, kind: input, shape index: {}]
  %s3 = inlined_call_operand.hbm [shape: bf16[2,128,128], index: 3, kind: input, shape index: {}]
  %s4 = inlined_call_operand.vmem [shape: f32[2,1,128], index: 4, kind: input, shape index: {}]
  %s5 = inlined_call_operand.hbm [shape: bf16[128,128], index: 5, kind: input, shape index: {}]
  %s6 = inlined_call_operand.vmem [shape: f32[1,128], index: 6, kind: input, shape index: {}]
  %s7 = inlined_call_operand.hbm [shape: f32[128,128], index: 7, kind: output, shape index: {}]
  %s8 = sld [smem:[#allocation0]]
  $region54: #{tpu_custom_call.1} parent=0
    _
  %s10 = ssub.s32 1, %s8
  %s11 = scalar_select 0, %s10, %s8
  $region1: #{tpu_custom_call.1} parent=0
    #allocation3 [shape = 'u8[32768]{0}', space=vmem, size = 0x8000, scoped, tag = 'input window, operand 0, single buffered']
    #allocation4 [shape = 's32[1]{0}', space=sflag, size = 0x4, scoped, tag = 'scoped memory for tpu_custom_call.1']
    #allocation5 [shape = 's32[1]{0}', space=sflag, size = 0x4, scoped, tag = 'scoped memory for tpu_custom_call.1']
    #allocation6 [shape = 'u8[32768]{0}', space=vmem, size = 0x8000, scoped, tag = 'input window, operand 1, single buffered']
    #allocation7 [shape = 's32[1]{0}', space=sflag, size = 0x4, scoped, tag = 'scoped memory for tpu_custom_call.1']
    #allocation8 [shape = 'u8[65536]{0}', space=vmem, size = 0x10000, scoped, tag = 'input window, operand 3, single buffered']
    #allocation9 [shape = 'u8[32768]{0}', space=vmem, size = 0x8000, scoped, tag = 'input window, operand 5, single buffered']
    #allocation10 [shape = 's32[1]{0}', space=sflag, size = 0x4, scoped, tag = 'scoped memory for tpu_custom_call.1']
    #allocation11 [shape = 'u8[65536]{0}', space=vmem, size = 0x10000, scoped, tag = 'output window, operand 0, single buffered']
    %12 = vsyncpa [#allocation4], 0
    %13 = vsyncpa [#allocation7], 0
    %14 = vsyncpa [#allocation10], 0
    %15 = vsyncpa [#allocation5], 0
    // Predicated region
    $region2: #{tpu_custom_call.1} parent=1 // pred_check
      _
    $region3: #{tpu_custom_call.1} parent=1 // pred_check_branch
      %17 = sbr.rel (0) target = $region5
    $region4: #{tpu_custom_call.1} parent=1 // pred_region
      %19 = vsyncadd [#allocation4], 0
      %s20 = sshll.u32 %s0, 4
      %s21 = int_to_ptr.hbm [resolvable:$true] %s20
      %s22 = sshll.u32 [#allocation3], 4
      %s23 = int_to_ptr.vmem [resolvable:$true] %s22
      %28 = dma.hbm_to_vmem [thread:$0]  %s21, 1024, %s23, [#allocation4], 64, 64, 4
    $region5: #{tpu_custom_call.1} parent=1 // pred_fallthru
      _
    // Predicated region
    $region6: #{tpu_custom_call.1} parent=1 // pred_check
      _
    $region7: #{tpu_custom_call.1} parent=1 // pred_check_branch
      %30 = sbr.rel (0) target = $region9
    $region8: #{tpu_custom_call.1} parent=1 // pred_region
      %32 = vsyncadd [#allocation7], 0
      %s33 = sshll.u32 %s1, 4
      %s34 = int_to_ptr.hbm [resolvable:$true] %s33
      %s35 = sshll.u32 [#allocation6], 4
      %s36 = int_to_ptr.vmem [resolvable:$true] %s35
      %41 = dma.hbm_to_vmem [thread:$0]  %s34, 1024, %s36, [#allocation7], 64, 64, 4
    $region9: #{tpu_custom_call.1} parent=1 // pred_fallthru
      _
    // Predicated region
    $region10: #{tpu_custom_call.1} parent=1 // pred_check
      _
    $region11: #{tpu_custom_call.1} parent=1 // pred_check_branch
      %43 = sbr.rel (0) target = $region13
    $region12: #{tpu_custom_call.1} parent=1 // pred_region
      _
    $region13: #{tpu_custom_call.1} parent=1 // pred_fallthru
      _
    // Predicated region
    $region14: #{tpu_custom_call.1} parent=1 // pred_check
      _
    $region15: #{tpu_custom_call.1} parent=1 // pred_check_branch
      %45 = sbr.rel (0) target = $region17
    $region16: #{tpu_custom_call.1} parent=1 // pred_region
      %47 = vsyncadd [#allocation7], 0
      %s48 = sshll.u32 %s3, 4
      %s49 = int_to_ptr.hbm [resolvable:$true] %s48
      %s50 = sshll.u32 [#allocation8], 4
      %s51 = int_to_ptr.vmem [resolvable:$true] %s50
      %56 = dma.hbm_to_vmem [thread:$0]  %s49, 2048, %s51, [#allocation7], 64, 64, 4
    $region17: #{tpu_custom_call.1} parent=1 // pred_fallthru
      _
    // Predicated region
    $region18: #{tpu_custom_call.1} parent=1 // pred_check
      _
    $region19: #{tpu_custom_call.1} parent=1 // pred_check_branch
      %58 = sbr.rel (0) target = $region21
    $region20: #{tpu_custom_call.1} parent=1 // pred_region
      _
    $region21: #{tpu_custom_call.1} parent=1 // pred_fallthru
      _
    // Predicated region
    $region22: #{tpu_custom_call.1} parent=1 // pred_check
      _
    $region23: #{tpu_custom_call.1} parent=1 // pred_check_branch
      %60 = sbr.rel (0) target = $region25
    $region24: #{tpu_custom_call.1} parent=1 // pred_region
      %62 = vsyncadd [#allocation10], 0
      %s63 = sshll.u32 %s5, 4
      %s64 = int_to_ptr.hbm [resolvable:$true] %s63
      %s65 = sshll.u32 [#allocation9], 4
      %s66 = int_to_ptr.vmem [resolvable:$true] %s65
      %71 = dma.hbm_to_vmem [thread:$0]  %s64, 1024, %s66, [#allocation10], 64, 64, 4
    $region25: #{tpu_custom_call.1} parent=1 // pred_fallthru
      _
    // Predicated region
    $region26: #{tpu_custom_call.1} parent=1 // pred_check
      _
    $region27: #{tpu_custom_call.1} parent=1 // pred_check_branch
      %73 = sbr.rel (0) target = $region29
    $region28: #{tpu_custom_call.1} parent=1 // pred_region
      _
    $region29: #{tpu_custom_call.1} parent=1 // pred_fallthru
      _
    // Predicated region
    $region30: #{tpu_custom_call.1} parent=1 // pred_check
      _
    $region31: #{tpu_custom_call.1} parent=1 // pred_check_branch
      %75 = sbr.rel (0) target = $region33
    $region32: #{tpu_custom_call.1} parent=1 // pred_region
      %77 = dma.done [#allocation4], 1024
    $region33: #{tpu_custom_call.1} parent=1 // pred_fallthru
      _
    // Predicated region
    $region34: #{tpu_custom_call.1} parent=1 // pred_check
      _
    $region35: #{tpu_custom_call.1} parent=1 // pred_check_branch
      %79 = sbr.rel (0) target = $region37
    $region36: #{tpu_custom_call.1} parent=1 // pred_region
      %81 = dma.done [#allocation7], 1024
    $region37: #{tpu_custom_call.1} parent=1 // pred_fallthru
      _
    // Predicated region
    $region38: #{tpu_custom_call.1} parent=1 // pred_check
      _
    $region39: #{tpu_custom_call.1} parent=1 // pred_check_branch
      %83 = sbr.rel (0) target = $region41
    $region40: #{tpu_custom_call.1} parent=1 // pred_region
      %85 = dma.done [#allocation7], 2048
    $region41: #{tpu_custom_call.1} parent=1 // pred_fallthru
      _
    // Predicated region
    $region42: #{tpu_custom_call.1} parent=1 // pred_check
      _
    $region43: #{tpu_custom_call.1} parent=1 // pred_check_branch
      %87 = sbr.rel (0) target = $region45
    $region44: #{tpu_custom_call.1} parent=1 // pred_region
      %89 = dma.done [#allocation10], 1024
    $region45: #{tpu_custom_call.1} parent=1 // pred_fallthru
      _
    %v90 = vld [vmem:[#allocation3] sm:$0xf]
    %v91 = vld [vmem:[#allocation3 + $0x4] sm:$0xf]
    %v92 = vld [vmem:[#allocation3 + $0x8] sm:$0xf]
    %v93 = vld [vmem:[#allocation3 + $0xc] sm:$0xf]
    %v94 = vld [vmem:[#allocation3 + $0x10] sm:$0xf]
    %v95 = vld [vmem:[#allocation3 + $0x14] sm:$0xf]
    %v96 = vld [vmem:[#allocation3 + $0x18] sm:$0xf]
    %v97 = vld [vmem:[#allocation3 + $0x1c] sm:$0xf]
    %v98 = vld [vmem:[#allocation3 + $0x20] sm:$0xf]
    %v99 = vld [vmem:[#allocation3 + $0x24] sm:$0xf]
    %v100 = vld [vmem:[#allocation3 + $0x28] sm:$0xf]
    %v101 = vld [vmem:[#allocation3 + $0x2c] sm:$0xf]
    %v102 = vld [vmem:[#allocation3 + $0x30] sm:$0xf]
    %v103 = vld [vmem:[#allocation3 + $0x34] sm:$0xf]
    %v104 = vld [vmem:[#allocation3 + $0x38] sm:$0xf]
    %v105 = vld [vmem:[#allocation3 + $0x3c] sm:$0xf]
    %v106 = vld [vmem:[#allocation6] sm:$0xf]
    %v107 = vld [vmem:[#allocation6 + $0x4] sm:$0xf]
    %v108 = vld [vmem:[#allocation6 + $0x8] sm:$0xf]
    %v109 = vld [vmem:[#allocation6 + $0xc] sm:$0xf]
    %v110 = vld [vmem:[#allocation6 + $0x10] sm:$0xf]
    %v111 = vld [vmem:[#allocation6 + $0x14] sm:$0xf]
    %v112 = vld [vmem:[#allocation6 + $0x18] sm:$0xf]
    %v113 = vld [vmem:[#allocation6 + $0x1c] sm:$0xf]
    %v114 = vld [vmem:[#allocation6 + $0x20] sm:$0xf]
    %v115 = vld [vmem:[#allocation6 + $0x24] sm:$0xf]
    %v116 = vld [vmem:[#allocation6 + $0x28] sm:$0xf]
    %v117 = vld [vmem:[#allocation6 + $0x2c] sm:$0xf]
    %v118 = vld [vmem:[#allocation6 + $0x30] sm:$0xf]
    %v119 = vld [vmem:[#allocation6 + $0x34] sm:$0xf]
    %v120 = vld [vmem:[#allocation6 + $0x38] sm:$0xf]
    %v121 = vld [vmem:[#allocation6 + $0x3c] sm:$0xf]
    %v122 = vld [vmem:[%s2] sm:$0x1]
    %v124 = vperm.slane %v122, 0
    %v142 = vunpack.c.l.b16 %v90
    %v143 = vunpack.c.l.b16 %v91
    %v144 = vunpack.c.l.b16 %v92
    %v145 = vunpack.c.l.b16 %v93
    %v146 = vunpack.c.l.b16 %v94
    %v147 = vunpack.c.l.b16 %v95
    %v148 = vunpack.c.l.b16 %v96
    %v149 = vunpack.c.l.b16 %v97
    %v150 = vunpack.c.l.b16 %v98
    %v151 = vunpack.c.l.b16 %v99
    %v152 = vunpack.c.l.b16 %v100
    %v153 = vunpack.c.l.b16 %v101
    %v154 = vunpack.c.l.b16 %v102
    %v155 = vunpack.c.l.b16 %v103
    %v156 = vunpack.c.l.b16 %v104
    %v157 = vunpack.c.l.b16 %v105
    %v158 = vpack.c.b16 %v143, %v142
    %v159 = vpack.c.b16 %v145, %v144
    %v160 = vpack.c.b16 %v147, %v146
    %v161 = vpack.c.b16 %v149, %v148
    %v162 = vpack.c.b16 %v151, %v150
    %v163 = vpack.c.b16 %v153, %v152
    %v164 = vpack.c.b16 %v155, %v154
    %v165 = vpack.c.b16 %v157, %v156
    %v190 = vunpack.c.l.b16 %v106
    %v191 = vunpack.c.l.b16 %v107
    %v192 = vunpack.c.l.b16 %v108
    %v193 = vunpack.c.l.b16 %v109
    %v194 = vunpack.c.l.b16 %v110
    %v195 = vunpack.c.l.b16 %v111
    %v196 = vunpack.c.l.b16 %v112
    %v197 = vunpack.c.l.b16 %v113
    %v198 = vunpack.c.l.b16 %v114
    %v199 = vunpack.c.l.b16 %v115
    %v200 = vunpack.c.l.b16 %v116
    %v201 = vunpack.c.l.b16 %v117
    %v202 = vunpack.c.l.b16 %v118
    %v203 = vunpack.c.l.b16 %v119
    %v204 = vunpack.c.l.b16 %v120
    %v205 = vunpack.c.l.b16 %v121
    %v206 = vpack.c.b16 %v191, %v190
    %v207 = vpack.c.b16 %v193, %v192
    %v208 = vpack.c.b16 %v195, %v194
    %v209 = vpack.c.b16 %v197, %v196
    %v210 = vpack.c.b16 %v199, %v198
    %v211 = vpack.c.b16 %v201, %v200
    %v212 = vpack.c.b16 %v203, %v202
    %v213 = vpack.c.b16 %v205, %v204
    %222 = vmatpush.bf16.msra.mxu0 %v213
    %223 = vmatpush.bf16.msra.mxu0 %v212
    %224 = vmatpush.bf16.msra.mxu0 %v211
    %225 = vmatpush.bf16.msra.mxu0 %v210
    %226 = vmatpush.bf16.msra.mxu0 %v209
    %227 = vmatpush.bf16.msra.mxu0 %v208
    %228 = vmatpush.bf16.msra.mxu0 %v207
    %229 = vmatpush.bf16.msra.mxu0 %v206
    %230 = vmatmul.bf16.gmra.mxu0 %v158
    %v231 = vpop.f32.mrf.mxu0
    %v232 = vadd.f32 %v124, %v231
    %v233 = vpop.f32.mrf.mxu0
    %v234 = vadd.f32 %v124, %v233
    %235 = vmatmul.bf16.gmra.mxu0 %v159
    %v236 = vpop.f32.mrf.mxu0
    %v237 = vadd.f32 %v124, %v236
    %v238 = vpop.f32.mrf.mxu0
    %v239 = vadd.f32 %v124, %v238
    %240 = vmatmul.bf16.gmra.mxu0 %v160
    %v241 = vpop.f32.mrf.mxu0
    %v242 = vadd.f32 %v124, %v241
    %v243 = vpop.f32.mrf.mxu0
    %v244 = vadd.f32 %v124, %v243
    %245 = vmatmul.bf16.gmra.mxu0 %v161
    %v246 = vpop.f32.mrf.mxu0
    %v247 = vadd.f32 %v124, %v246
    %v248 = vpop.f32.mrf.mxu0
    %v249 = vadd.f32 %v124, %v248
    %250 = vmatmul.bf16.gmra.mxu0 %v162
    %v251 = vpop.f32.mrf.mxu0
    %v252 = vadd.f32 %v124, %v251
    %v253 = vpop.f32.mrf.mxu0
    %v254 = vadd.f32 %v124, %v253
    %255 = vmatmul.bf16.gmra.mxu0 %v163
    %v256 = vpop.f32.mrf.mxu0
    %v257 = vadd.f32 %v124, %v256
    %v258 = vpop.f32.mrf.mxu0
    %v259 = vadd.f32 %v124, %v258
    %260 = vmatmul.bf16.gmra.mxu0 %v164
    %v261 = vpop.f32.mrf.mxu0
    %v262 = vadd.f32 %v124, %v261
    %v263 = vpop.f32.mrf.mxu0
    %v264 = vadd.f32 %v124, %v263
    %265 = vmatmul.bf16.gmra.mxu0 %v165
    %v266 = vpop.f32.mrf.mxu0
    %v267 = vadd.f32 %v124, %v266
    %v268 = vpop.f32.mrf.mxu0
    %v269 = vadd.f32 %v124, %v268
    %270 = vdwg.mxu0
    %v271 = vmax.f32 %v232, 0.0
    %v272 = vmax.f32 %v234, 0.0
    %v273 = vmax.f32 %v237, 0.0
    %v274 = vmax.f32 %v239, 0.0
    %v275 = vmax.f32 %v242, 0.0
    %v276 = vmax.f32 %v244, 0.0
    %v277 = vmax.f32 %v247, 0.0
    %v278 = vmax.f32 %v249, 0.0
    %v279 = vmax.f32 %v252, 0.0
    %v280 = vmax.f32 %v254, 0.0
    %v281 = vmax.f32 %v257, 0.0
    %v282 = vmax.f32 %v259, 0.0
    %v283 = vmax.f32 %v262, 0.0
    %v284 = vmax.f32 %v264, 0.0
    %v285 = vmax.f32 %v267, 0.0
    %v286 = vmax.f32 %v269, 0.0
    %v287 = vpack.c.bf16 %v271, %v271
    %v288 = vpack.c.bf16 %v272, %v272
    %v289 = vpack.c.bf16 %v273, %v273
    %v290 = vpack.c.bf16 %v274, %v274
    %v291 = vpack.c.bf16 %v275, %v275
    %v292 = vpack.c.bf16 %v276, %v276
    %v293 = vpack.c.bf16 %v277, %v277
    %v294 = vpack.c.bf16 %v278, %v278
    %v295 = vpack.c.bf16 %v279, %v279
    %v296 = vpack.c.bf16 %v280, %v280
    %v297 = vpack.c.bf16 %v281, %v281
    %v298 = vpack.c.bf16 %v282, %v282
    %v299 = vpack.c.bf16 %v283, %v283
    %v300 = vpack.c.bf16 %v284, %v284
    %v301 = vpack.c.bf16 %v285, %v285
    %v302 = vpack.c.bf16 %v286, %v286
    %303 = vst [vmem:[#allocation2] sm:$0xf] %v287
    %304 = vst [vmem:[#allocation2 + $0x4] sm:$0xf] %v288
    %305 = vst [vmem:[#allocation2 + $0x8] sm:$0xf] %v289
    %306 = vst [vmem:[#allocation2 + $0xc] sm:$0xf] %v290
    %307 = vst [vmem:[#allocation2 + $0x10] sm:$0xf] %v291
    %308 = vst [vmem:[#allocation2 + $0x14] sm:$0xf] %v292
    %309 = vst [vmem:[#allocation2 + $0x18] sm:$0xf] %v293
    %310 = vst [vmem:[#allocation2 + $0x1c] sm:$0xf] %v294
    %311 = vst [vmem:[#allocation2 + $0x20] sm:$0xf] %v295
    %312 = vst [vmem:[#allocation2 + $0x24] sm:$0xf] %v296
    %313 = vst [vmem:[#allocation2 + $0x28] sm:$0xf] %v297
    %314 = vst [vmem:[#allocation2 + $0x2c] sm:$0xf] %v298
    %315 = vst [vmem:[#allocation2 + $0x30] sm:$0xf] %v299
    %316 = vst [vmem:[#allocation2 + $0x34] sm:$0xf] %v300
    %317 = vst [vmem:[#allocation2 + $0x38] sm:$0xf] %v301
    %318 = vst [vmem:[#allocation2 + $0x3c] sm:$0xf] %v302
    %v319 = vld [vmem:[#allocation2] sm:$0xf]
    %v320 = vld [vmem:[#allocation2 + $0x4] sm:$0xf]
    %v321 = vld [vmem:[#allocation2 + $0x8] sm:$0xf]
    %v322 = vld [vmem:[#allocation2 + $0xc] sm:$0xf]
    %v323 = vld [vmem:[#allocation2 + $0x10] sm:$0xf]
    %v324 = vld [vmem:[#allocation2 + $0x14] sm:$0xf]
    %v325 = vld [vmem:[#allocation2 + $0x18] sm:$0xf]
    %v326 = vld [vmem:[#allocation2 + $0x1c] sm:$0xf]
    %v327 = vld [vmem:[#allocation2 + $0x20] sm:$0xf]
    %v328 = vld [vmem:[#allocation2 + $0x24] sm:$0xf]
    %v329 = vld [vmem:[#allocation2 + $0x28] sm:$0xf]
    %v330 = vld [vmem:[#allocation2 + $0x2c] sm:$0xf]
    %v331 = vld [vmem:[#allocation2 + $0x30] sm:$0xf]
    %v332 = vld [vmem:[#allocation2 + $0x34] sm:$0xf]
    %v333 = vld [vmem:[#allocation2 + $0x38] sm:$0xf]
    %v334 = vld [vmem:[#allocation2 + $0x3c] sm:$0xf]
    %v335 = vld [vmem:[#allocation8] sm:$0xf]
    %v336 = vld [vmem:[#allocation8 + $0x4] sm:$0xf]
    %v337 = vld [vmem:[#allocation8 + $0x8] sm:$0xf]
    %v338 = vld [vmem:[#allocation8 + $0xc] sm:$0xf]
    %v339 = vld [vmem:[#allocation8 + $0x10] sm:$0xf]
    %v340 = vld [vmem:[#allocation8 + $0x14] sm:$0xf]
    %v341 = vld [vmem:[#allocation8 + $0x18] sm:$0xf]
    %v342 = vld [vmem:[#allocation8 + $0x1c] sm:$0xf]
    %v343 = vld [vmem:[#allocation8 + $0x20] sm:$0xf]
    %v344 = vld [vmem:[#allocation8 + $0x24] sm:$0xf]
    %v345 = vld [vmem:[#allocation8 + $0x28] sm:$0xf]
    %v346 = vld [vmem:[#allocation8 + $0x2c] sm:$0xf]
    %v347 = vld [vmem:[#allocation8 + $0x30] sm:$0xf]
    %v348 = vld [vmem:[#allocation8 + $0x34] sm:$0xf]
    %v349 = vld [vmem:[#allocation8 + $0x38] sm:$0xf]
    %v350 = vld [vmem:[#allocation8 + $0x3c] sm:$0xf]
    %v351 = vld [vmem:[%s4] sm:$0x1]
    %v353 = vperm.slane %v351, 0
    %v371 = vunpack.c.l.b16 %v319
    %v372 = vunpack.c.l.b16 %v320
    %v373 = vunpack.c.l.b16 %v321
    %v374 = vunpack.c.l.b16 %v322
    %v375 = vunpack.c.l.b16 %v323
    %v376 = vunpack.c.l.b16 %v324
    %v377 = vunpack.c.l.b16 %v325
    %v378 = vunpack.c.l.b16 %v326
    %v379 = vunpack.c.l.b16 %v327
    %v380 = vunpack.c.l.b16 %v328
    %v381 = vunpack.c.l.b16 %v329
    %v382 = vunpack.c.l.b16 %v330
    %v383 = vunpack.c.l.b16 %v331
    %v384 = vunpack.c.l.b16 %v332
    %v385 = vunpack.c.l.b16 %v333
    %v386 = vunpack.c.l.b16 %v334
    %v387 = vpack.c.b16 %v372, %v371
    %v388 = vpack.c.b16 %v374, %v373
    %v389 = vpack.c.b16 %v376, %v375
    %v390 = vpack.c.b16 %v378, %v377
    %v391 = vpack.c.b16 %v380, %v379
    %v392 = vpack.c.b16 %v382, %v381
    %v393 = vpack.c.b16 %v384, %v383
    %v394 = vpack.c.b16 %v386, %v385
    %v419 = vunpack.c.l.b16 %v335
    %v420 = vunpack.c.l.b16 %v336
    %v421 = vunpack.c.l.b16 %v337
    %v422 = vunpack.c.l.b16 %v338
    %v423 = vunpack.c.l.b16 %v339
    %v424 = vunpack.c.l.b16 %v340
    %v425 = vunpack.c.l.b16 %v341
    %v426 = vunpack.c.l.b16 %v342
    %v427 = vunpack.c.l.b16 %v343
    %v428 = vunpack.c.l.b16 %v344
    %v429 = vunpack.c.l.b16 %v345
    %v430 = vunpack.c.l.b16 %v346
    %v431 = vunpack.c.l.b16 %v347
    %v432 = vunpack.c.l.b16 %v348
    %v433 = vunpack.c.l.b16 %v349
    %v434 = vunpack.c.l.b16 %v350
    %v435 = vpack.c.b16 %v420, %v419
    %v436 = vpack.c.b16 %v422, %v421
    %v437 = vpack.c.b16 %v424, %v423
    %v438 = vpack.c.b16 %v426, %v425
    %v439 = vpack.c.b16 %v428, %v427
    %v440 = vpack.c.b16 %v430, %v429
    %v441 = vpack.c.b16 %v432, %v431
    %v442 = vpack.c.b16 %v434, %v433
    %451 = vmatpush.bf16.msra.mxu0 %v442
    %452 = vmatpush.bf16.msra.mxu0 %v441
    %453 = vmatpush.bf16.msra.mxu0 %v440
    %454 = vmatpush.bf16.msra.mxu0 %v439
    %455 = vmatpush.bf16.msra.mxu0 %v438
    %456 = vmatpush.bf16.msra.mxu0 %v437
    %457 = vmatpush.bf16.msra.mxu0 %v436
    %458 = vmatpush.bf16.msra.mxu0 %v435
    %459 = vmatmul.bf16.gmra.mxu0 %v387
    %v460 = vpop.f32.mrf.mxu0
    %v461 = vadd.f32 %v353, %v460
    %v462 = vpop.f32.mrf.mxu0
    %v463 = vadd.f32 %v353, %v462
    %464 = vmatmul.bf16.gmra.mxu0 %v388
    %v465 = vpop.f32.mrf.mxu0
    %v466 = vadd.f32 %v353, %v465
    %v467 = vpop.f32.mrf.mxu0
    %v468 = vadd.f32 %v353, %v467
    %469 = vmatmul.bf16.gmra.mxu0 %v389
    %v470 = vpop.f32.mrf.mxu0
    %v471 = vadd.f32 %v353, %v470
    %v472 = vpop.f32.mrf.mxu0
    %v473 = vadd.f32 %v353, %v472
    %474 = vmatmul.bf16.gmra.mxu0 %v390
    %v475 = vpop.f32.mrf.mxu0
    %v476 = vadd.f32 %v353, %v475
    %v477 = vpop.f32.mrf.mxu0
    %v478 = vadd.f32 %v353, %v477
    %479 = vmatmul.bf16.gmra.mxu0 %v391
    %v480 = vpop.f32.mrf.mxu0
    %v481 = vadd.f32 %v353, %v480
    %v482 = vpop.f32.mrf.mxu0
    %v483 = vadd.f32 %v353, %v482
    %484 = vmatmul.bf16.gmra.mxu0 %v392
    %v485 = vpop.f32.mrf.mxu0
    %v486 = vadd.f32 %v353, %v485
    %v487 = vpop.f32.mrf.mxu0
    %v488 = vadd.f32 %v353, %v487
    %489 = vmatmul.bf16.gmra.mxu0 %v393
    %v490 = vpop.f32.mrf.mxu0
    %v491 = vadd.f32 %v353, %v490
    %v492 = vpop.f32.mrf.mxu0
    %v493 = vadd.f32 %v353, %v492
    %494 = vmatmul.bf16.gmra.mxu0 %v394
    %v495 = vpop.f32.mrf.mxu0
    %v496 = vadd.f32 %v353, %v495
    %v497 = vpop.f32.mrf.mxu0
    %v498 = vadd.f32 %v353, %v497
    %499 = vdwg.mxu0
    %v500 = vmax.f32 %v461, 0.0
    %v501 = vmax.f32 %v463, 0.0
    %v502 = vmax.f32 %v466, 0.0
    %v503 = vmax.f32 %v468, 0.0
    %v504 = vmax.f32 %v471, 0.0
    %v505 = vmax.f32 %v473, 0.0
    %v506 = vmax.f32 %v476, 0.0
    %v507 = vmax.f32 %v478, 0.0
    %v508 = vmax.f32 %v481, 0.0
    %v509 = vmax.f32 %v483, 0.0
    %v510 = vmax.f32 %v486, 0.0
    %v511 = vmax.f32 %v488, 0.0
    %v512 = vmax.f32 %v491, 0.0
    %v513 = vmax.f32 %v493, 0.0
    %v514 = vmax.f32 %v496, 0.0
    %v515 = vmax.f32 %v498, 0.0
    %v516 = vpack.c.bf16 %v500, %v500
    %v517 = vpack.c.bf16 %v501, %v501
    %v518 = vpack.c.bf16 %v502, %v502
    %v519 = vpack.c.bf16 %v503, %v503
    %v520 = vpack.c.bf16 %v504, %v504
    %v521 = vpack.c.bf16 %v505, %v505
    %v522 = vpack.c.bf16 %v506, %v506
    %v523 = vpack.c.bf16 %v507, %v507
    %v524 = vpack.c.bf16 %v508, %v508
    %v525 = vpack.c.bf16 %v509, %v509
    %v526 = vpack.c.bf16 %v510, %v510
    %v527 = vpack.c.bf16 %v511, %v511
    %v528 = vpack.c.bf16 %v512, %v512
    %v529 = vpack.c.bf16 %v513, %v513
    %v530 = vpack.c.bf16 %v514, %v514
    %v531 = vpack.c.bf16 %v515, %v515
    %532 = vst [vmem:[#allocation2] sm:$0xf] %v516
    %533 = vst [vmem:[#allocation2 + $0x4] sm:$0xf] %v517
    %534 = vst [vmem:[#allocation2 + $0x8] sm:$0xf] %v518
    %535 = vst [vmem:[#allocation2 + $0xc] sm:$0xf] %v519
    %536 = vst [vmem:[#allocation2 + $0x10] sm:$0xf] %v520
    %537 = vst [vmem:[#allocation2 + $0x14] sm:$0xf] %v521
    %538 = vst [vmem:[#allocation2 + $0x18] sm:$0xf] %v522
    %539 = vst [vmem:[#allocation2 + $0x1c] sm:$0xf] %v523
    %540 = vst [vmem:[#allocation2 + $0x20] sm:$0xf] %v524
    %541 = vst [vmem:[#allocation2 + $0x24] sm:$0xf] %v525
    %542 = vst [vmem:[#allocation2 + $0x28] sm:$0xf] %v526
    %543 = vst [vmem:[#allocation2 + $0x2c] sm:$0xf] %v527
    %544 = vst [vmem:[#allocation2 + $0x30] sm:$0xf] %v528
    %545 = vst [vmem:[#allocation2 + $0x34] sm:$0xf] %v529
    %546 = vst [vmem:[#allocation2 + $0x38] sm:$0xf] %v530
    %547 = vst [vmem:[#allocation2 + $0x3c] sm:$0xf] %v531
    %v548 = vld [vmem:[#allocation2] sm:$0xf]
    %v549 = vld [vmem:[#allocation2 + $0x4] sm:$0xf]
    %v550 = vld [vmem:[#allocation2 + $0x8] sm:$0xf]
    %v551 = vld [vmem:[#allocation2 + $0xc] sm:$0xf]
    %v552 = vld [vmem:[#allocation2 + $0x10] sm:$0xf]
    %v553 = vld [vmem:[#allocation2 + $0x14] sm:$0xf]
    %v554 = vld [vmem:[#allocation2 + $0x18] sm:$0xf]
    %v555 = vld [vmem:[#allocation2 + $0x1c] sm:$0xf]
    %v556 = vld [vmem:[#allocation2 + $0x20] sm:$0xf]
    %v557 = vld [vmem:[#allocation2 + $0x24] sm:$0xf]
    %v558 = vld [vmem:[#allocation2 + $0x28] sm:$0xf]
    %v559 = vld [vmem:[#allocation2 + $0x2c] sm:$0xf]
    %v560 = vld [vmem:[#allocation2 + $0x30] sm:$0xf]
    %v561 = vld [vmem:[#allocation2 + $0x34] sm:$0xf]
    %v562 = vld [vmem:[#allocation2 + $0x38] sm:$0xf]
    %v563 = vld [vmem:[#allocation2 + $0x3c] sm:$0xf]
    %s564 = scalar_lea.vmem [#allocation8], 64
    %v565 = vld [vmem:[%s564] sm:$0xf]
    %v566 = vld [vmem:[%s564 + $0x4] sm:$0xf]
    %v567 = vld [vmem:[%s564 + $0x8] sm:$0xf]
    %v568 = vld [vmem:[%s564 + $0xc] sm:$0xf]
    %v569 = vld [vmem:[%s564 + $0x10] sm:$0xf]
    %v570 = vld [vmem:[%s564 + $0x14] sm:$0xf]
    %v571 = vld [vmem:[%s564 + $0x18] sm:$0xf]
    %v572 = vld [vmem:[%s564 + $0x1c] sm:$0xf]
    %v573 = vld [vmem:[%s564 + $0x20] sm:$0xf]
    %v574 = vld [vmem:[%s564 + $0x24] sm:$0xf]
    %v575 = vld [vmem:[%s564 + $0x28] sm:$0xf]
    %v576 = vld [vmem:[%s564 + $0x2c] sm:$0xf]
    %v577 = vld [vmem:[%s564 + $0x30] sm:$0xf]
    %v578 = vld [vmem:[%s564 + $0x34] sm:$0xf]
    %v579 = vld [vmem:[%s564 + $0x38] sm:$0xf]
    %v580 = vld [vmem:[%s564 + $0x3c] sm:$0xf]
    %s581 = scalar_lea.vmem %s4, 1
    %v582 = vld [vmem:[%s581] sm:$0x1]
    %v584 = vperm.slane %v582, 0
    %v602 = vunpack.c.l.b16 %v548
    %v603 = vunpack.c.l.b16 %v549
    %v604 = vunpack.c.l.b16 %v550
    %v605 = vunpack.c.l.b16 %v551
    %v606 = vunpack.c.l.b16 %v552
    %v607 = vunpack.c.l.b16 %v553
    %v608 = vunpack.c.l.b16 %v554
    %v609 = vunpack.c.l.b16 %v555
    %v610 = vunpack.c.l.b16 %v556
    %v611 = vunpack.c.l.b16 %v557
    %v612 = vunpack.c.l.b16 %v558
    %v613 = vunpack.c.l.b16 %v559
    %v614 = vunpack.c.l.b16 %v560
    %v615 = vunpack.c.l.b16 %v561
    %v616 = vunpack.c.l.b16 %v562
    %v617 = vunpack.c.l.b16 %v563
    %v618 = vpack.c.b16 %v603, %v602
    %v619 = vpack.c.b16 %v605, %v604
    %v620 = vpack.c.b16 %v607, %v606
    %v621 = vpack.c.b16 %v609, %v608
    %v622 = vpack.c.b16 %v611, %v610
    %v623 = vpack.c.b16 %v613, %v612
    %v624 = vpack.c.b16 %v615, %v614
    %v625 = vpack.c.b16 %v617, %v616
    %v650 = vunpack.c.l.b16 %v565
    %v651 = vunpack.c.l.b16 %v566
    %v652 = vunpack.c.l.b16 %v567
    %v653 = vunpack.c.l.b16 %v568
    %v654 = vunpack.c.l.b16 %v569
    %v655 = vunpack.c.l.b16 %v570
    %v656 = vunpack.c.l.b16 %v571
    %v657 = vunpack.c.l.b16 %v572
    %v658 = vunpack.c.l.b16 %v573
    %v659 = vunpack.c.l.b16 %v574
    %v660 = vunpack.c.l.b16 %v575
    %v661 = vunpack.c.l.b16 %v576
    %v662 = vunpack.c.l.b16 %v577
    %v663 = vunpack.c.l.b16 %v578
    %v664 = vunpack.c.l.b16 %v579
    %v665 = vunpack.c.l.b16 %v580
    %v666 = vpack.c.b16 %v651, %v650
    %v667 = vpack.c.b16 %v653, %v652
    %v668 = vpack.c.b16 %v655, %v654
    %v669 = vpack.c.b16 %v657, %v656
    %v670 = vpack.c.b16 %v659, %v658
    %v671 = vpack.c.b16 %v661, %v660
    %v672 = vpack.c.b16 %v663, %v662
    %v673 = vpack.c.b16 %v665, %v664
    %682 = vmatpush.bf16.msra.mxu0 %v673
    %683 = vmatpush.bf16.msra.mxu0 %v672
    %684 = vmatpush.bf16.msra.mxu0 %v671
    %685 = vmatpush.bf16.msra.mxu0 %v670
    %686 = vmatpush.bf16.msra.mxu0 %v669
    %687 = vmatpush.bf16.msra.mxu0 %v668
    %688 = vmatpush.bf16.msra.mxu0 %v667
    %689 = vmatpush.bf16.msra.mxu0 %v666
    %690 = vmatmul.bf16.gmra.mxu0 %v618
    %v691 = vpop.f32.mrf.mxu0
    %v692 = vadd.f32 %v584, %v691
    %v693 = vpop.f32.mrf.mxu0
    %v694 = vadd.f32 %v584, %v693
    %695 = vmatmul.bf16.gmra.mxu0 %v619
    %v696 = vpop.f32.mrf.mxu0
    %v697 = vadd.f32 %v584, %v696
    %v698 = vpop.f32.mrf.mxu0
    %v699 = vadd.f32 %v584, %v698
    %700 = vmatmul.bf16.gmra.mxu0 %v620
    %v701 = vpop.f32.mrf.mxu0
    %v702 = vadd.f32 %v584, %v701
    %v703 = vpop.f32.mrf.mxu0
    %v704 = vadd.f32 %v584, %v703
    %705 = vmatmul.bf16.gmra.mxu0 %v621
    %v706 = vpop.f32.mrf.mxu0
    %v707 = vadd.f32 %v584, %v706
    %v708 = vpop.f32.mrf.mxu0
    %v709 = vadd.f32 %v584, %v708
    %710 = vmatmul.bf16.gmra.mxu0 %v622
    %v711 = vpop.f32.mrf.mxu0
    %v712 = vadd.f32 %v584, %v711
    %v713 = vpop.f32.mrf.mxu0
    %v714 = vadd.f32 %v584, %v713
    %715 = vmatmul.bf16.gmra.mxu0 %v623
    %v716 = vpop.f32.mrf.mxu0
    %v717 = vadd.f32 %v584, %v716
    %v718 = vpop.f32.mrf.mxu0
    %v719 = vadd.f32 %v584, %v718
    %720 = vmatmul.bf16.gmra.mxu0 %v624
    %v721 = vpop.f32.mrf.mxu0
    %v722 = vadd.f32 %v584, %v721
    %v723 = vpop.f32.mrf.mxu0
    %v724 = vadd.f32 %v584, %v723
    %725 = vmatmul.bf16.gmra.mxu0 %v625
    %v726 = vpop.f32.mrf.mxu0
    %v727 = vadd.f32 %v584, %v726
    %v728 = vpop.f32.mrf.mxu0
    %v729 = vadd.f32 %v584, %v728
    %730 = vdwg.mxu0
    %v731 = vmax.f32 %v692, 0.0
    %v732 = vmax.f32 %v694, 0.0
    %v733 = vmax.f32 %v697, 0.0
    %v734 = vmax.f32 %v699, 0.0
    %v735 = vmax.f32 %v702, 0.0
    %v736 = vmax.f32 %v704, 0.0
    %v737 = vmax.f32 %v707, 0.0
    %v738 = vmax.f32 %v709, 0.0
    %v739 = vmax.f32 %v712, 0.0
    %v740 = vmax.f32 %v714, 0.0
    %v741 = vmax.f32 %v717, 0.0
    %v742 = vmax.f32 %v719, 0.0
    %v743 = vmax.f32 %v722, 0.0
    %v744 = vmax.f32 %v724, 0.0
    %v745 = vmax.f32 %v727, 0.0
    %v746 = vmax.f32 %v729, 0.0
    %v747 = vpack.c.bf16 %v731, %v731
    %v748 = vpack.c.bf16 %v732, %v732
    %v749 = vpack.c.bf16 %v733, %v733
    %v750 = vpack.c.bf16 %v734, %v734
    %v751 = vpack.c.bf16 %v735, %v735
    %v752 = vpack.c.bf16 %v736, %v736
    %v753 = vpack.c.bf16 %v737, %v737
    %v754 = vpack.c.bf16 %v738, %v738
    %v755 = vpack.c.bf16 %v739, %v739
    %v756 = vpack.c.bf16 %v740, %v740
    %v757 = vpack.c.bf16 %v741, %v741
    %v758 = vpack.c.bf16 %v742, %v742
    %v759 = vpack.c.bf16 %v743, %v743
    %v760 = vpack.c.bf16 %v744, %v744
    %v761 = vpack.c.bf16 %v745, %v745
    %v762 = vpack.c.bf16 %v746, %v746
    %763 = vst [vmem:[#allocation2] sm:$0xf] %v747
    %764 = vst [vmem:[#allocation2 + $0x4] sm:$0xf] %v748
    %765 = vst [vmem:[#allocation2 + $0x8] sm:$0xf] %v749
    %766 = vst [vmem:[#allocation2 + $0xc] sm:$0xf] %v750
    %767 = vst [vmem:[#allocation2 + $0x10] sm:$0xf] %v751
    %768 = vst [vmem:[#allocation2 + $0x14] sm:$0xf] %v752
    %769 = vst [vmem:[#allocation2 + $0x18] sm:$0xf] %v753
    %770 = vst [vmem:[#allocation2 + $0x1c] sm:$0xf] %v754
    %771 = vst [vmem:[#allocation2 + $0x20] sm:$0xf] %v755
    %772 = vst [vmem:[#allocation2 + $0x24] sm:$0xf] %v756
    %773 = vst [vmem:[#allocation2 + $0x28] sm:$0xf] %v757
    %774 = vst [vmem:[#allocation2 + $0x2c] sm:$0xf] %v758
    %775 = vst [vmem:[#allocation2 + $0x30] sm:$0xf] %v759
    %776 = vst [vmem:[#allocation2 + $0x34] sm:$0xf] %v760
    %777 = vst [vmem:[#allocation2 + $0x38] sm:$0xf] %v761
    %778 = vst [vmem:[#allocation2 + $0x3c] sm:$0xf] %v762
    %v779 = vld [vmem:[#allocation2] sm:$0xf]
    %v780 = vld [vmem:[#allocation2 + $0x4] sm:$0xf]
    %v781 = vld [vmem:[#allocation2 + $0x8] sm:$0xf]
    %v782 = vld [vmem:[#allocation2 + $0xc] sm:$0xf]
    %v783 = vld [vmem:[#allocation2 + $0x10] sm:$0xf]
    %v784 = vld [vmem:[#allocation2 + $0x14] sm:$0xf]
    %v785 = vld [vmem:[#allocation2 + $0x18] sm:$0xf]
    %v786 = vld [vmem:[#allocation2 + $0x1c] sm:$0xf]
    %v787 = vld [vmem:[#allocation2 + $0x20] sm:$0xf]
    %v788 = vld [vmem:[#allocation2 + $0x24] sm:$0xf]
    %v789 = vld [vmem:[#allocation2 + $0x28] sm:$0xf]
    %v790 = vld [vmem:[#allocation2 + $0x2c] sm:$0xf]
    %v791 = vld [vmem:[#allocation2 + $0x30] sm:$0xf]
    %v792 = vld [vmem:[#allocation2 + $0x34] sm:$0xf]
    %v793 = vld [vmem:[#allocation2 + $0x38] sm:$0xf]
    %v794 = vld [vmem:[#allocation2 + $0x3c] sm:$0xf]
    %v795 = vld [vmem:[#allocation9] sm:$0xf]
    %v796 = vld [vmem:[#allocation9 + $0x4] sm:$0xf]
    %v797 = vld [vmem:[#allocation9 + $0x8] sm:$0xf]
    %v798 = vld [vmem:[#allocation9 + $0xc] sm:$0xf]
    %v799 = vld [vmem:[#allocation9 + $0x10] sm:$0xf]
    %v800 = vld [vmem:[#allocation9 + $0x14] sm:$0xf]
    %v801 = vld [vmem:[#allocation9 + $0x18] sm:$0xf]
    %v802 = vld [vmem:[#allocation9 + $0x1c] sm:$0xf]
    %v803 = vld [vmem:[#allocation9 + $0x20] sm:$0xf]
    %v804 = vld [vmem:[#allocation9 + $0x24] sm:$0xf]
    %v805 = vld [vmem:[#allocation9 + $0x28] sm:$0xf]
    %v806 = vld [vmem:[#allocation9 + $0x2c] sm:$0xf]
    %v807 = vld [vmem:[#allocation9 + $0x30] sm:$0xf]
    %v808 = vld [vmem:[#allocation9 + $0x34] sm:$0xf]
    %v809 = vld [vmem:[#allocation9 + $0x38] sm:$0xf]
    %v810 = vld [vmem:[#allocation9 + $0x3c] sm:$0xf]
    %v811 = vld [vmem:[%s6] sm:$0x1]
    %v813 = vperm.slane %v811, 0
    %v831 = vunpack.c.l.b16 %v779
    %v832 = vunpack.c.l.b16 %v780
    %v833 = vunpack.c.l.b16 %v781
    %v834 = vunpack.c.l.b16 %v782
    %v835 = vunpack.c.l.b16 %v783
    %v836 = vunpack.c.l.b16 %v784
    %v837 = vunpack.c.l.b16 %v785
    %v838 = vunpack.c.l.b16 %v786
    %v839 = vunpack.c.l.b16 %v787
    %v840 = vunpack.c.l.b16 %v788
    %v841 = vunpack.c.l.b16 %v789
    %v842 = vunpack.c.l.b16 %v790
    %v843 = vunpack.c.l.b16 %v791
    %v844 = vunpack.c.l.b16 %v792
    %v845 = vunpack.c.l.b16 %v793
    %v846 = vunpack.c.l.b16 %v794
    %v847 = vpack.c.b16 %v832, %v831
    %v848 = vpack.c.b16 %v834, %v833
    %v849 = vpack.c.b16 %v836, %v835
    %v850 = vpack.c.b16 %v838, %v837
    %v851 = vpack.c.b16 %v840, %v839
    %v852 = vpack.c.b16 %v842, %v841
    %v853 = vpack.c.b16 %v844, %v843
    %v854 = vpack.c.b16 %v846, %v845
    %v879 = vunpack.c.l.b16 %v795
    %v880 = vunpack.c.l.b16 %v796
    %v881 = vunpack.c.l.b16 %v797
    %v882 = vunpack.c.l.b16 %v798
    %v883 = vunpack.c.l.b16 %v799
    %v884 = vunpack.c.l.b16 %v800
    %v885 = vunpack.c.l.b16 %v801
    %v886 = vunpack.c.l.b16 %v802
    %v887 = vunpack.c.l.b16 %v803
    %v888 = vunpack.c.l.b16 %v804
    %v889 = vunpack.c.l.b16 %v805
    %v890 = vunpack.c.l.b16 %v806
    %v891 = vunpack.c.l.b16 %v807
    %v892 = vunpack.c.l.b16 %v808
    %v893 = vunpack.c.l.b16 %v809
    %v894 = vunpack.c.l.b16 %v810
    %v895 = vpack.c.b16 %v880, %v879
    %v896 = vpack.c.b16 %v882, %v881
    %v897 = vpack.c.b16 %v884, %v883
    %v898 = vpack.c.b16 %v886, %v885
    %v899 = vpack.c.b16 %v888, %v887
    %v900 = vpack.c.b16 %v890, %v889
    %v901 = vpack.c.b16 %v892, %v891
    %v902 = vpack.c.b16 %v894, %v893
    %911 = vmatpush.bf16.msra.mxu0 %v902
    %912 = vmatpush.bf16.msra.mxu0 %v901
    %913 = vmatpush.bf16.msra.mxu0 %v900
    %914 = vmatpush.bf16.msra.mxu0 %v899
    %915 = vmatpush.bf16.msra.mxu0 %v898
    %916 = vmatpush.bf16.msra.mxu0 %v897
    %917 = vmatpush.bf16.msra.mxu0 %v896
    %918 = vmatpush.bf16.msra.mxu0 %v895
    %919 = vmatmul.bf16.gmra.mxu0 %v847
    %v920 = vpop.f32.mrf.mxu0
    %v921 = vadd.f32 %v813, %v920
    %v922 = vpop.f32.mrf.mxu0
    %v923 = vadd.f32 %v813, %v922
    %924 = vmatmul.bf16.gmra.mxu0 %v848
    %v925 = vpop.f32.mrf.mxu0
    %v926 = vadd.f32 %v813, %v925
    %v927 = vpop.f32.mrf.mxu0
    %v928 = vadd.f32 %v813, %v927
    %929 = vmatmul.bf16.gmra.mxu0 %v849
    %v930 = vpop.f32.mrf.mxu0
    %v931 = vadd.f32 %v813, %v930
    %v932 = vpop.f32.mrf.mxu0
    %v933 = vadd.f32 %v813, %v932
    %934 = vmatmul.bf16.gmra.mxu0 %v850
    %v935 = vpop.f32.mrf.mxu0
    %v936 = vadd.f32 %v813, %v935
    %v937 = vpop.f32.mrf.mxu0
    %v938 = vadd.f32 %v813, %v937
    %939 = vmatmul.bf16.gmra.mxu0 %v851
    %v940 = vpop.f32.mrf.mxu0
    %v941 = vadd.f32 %v813, %v940
    %v942 = vpop.f32.mrf.mxu0
    %v943 = vadd.f32 %v813, %v942
    %944 = vmatmul.bf16.gmra.mxu0 %v852
    %v945 = vpop.f32.mrf.mxu0
    %v946 = vadd.f32 %v813, %v945
    %v947 = vpop.f32.mrf.mxu0
    %v948 = vadd.f32 %v813, %v947
    %949 = vmatmul.bf16.gmra.mxu0 %v853
    %v950 = vpop.f32.mrf.mxu0
    %v951 = vadd.f32 %v813, %v950
    %v952 = vpop.f32.mrf.mxu0
    %v953 = vadd.f32 %v813, %v952
    %954 = vmatmul.bf16.gmra.mxu0 %v854
    %v955 = vpop.f32.mrf.mxu0
    %v956 = vadd.f32 %v813, %v955
    %v957 = vpop.f32.mrf.mxu0
    %v958 = vadd.f32 %v813, %v957
    %959 = vdwg.mxu0
    %960 = vst [vmem:[#allocation11] sm:$0xff] %v921
    %961 = vst [vmem:[#allocation11 + $0x8] sm:$0xff] %v923
    %962 = vst [vmem:[#allocation11 + $0x10] sm:$0xff] %v926
    %963 = vst [vmem:[#allocation11 + $0x18] sm:$0xff] %v928
    %964 = vst [vmem:[#allocation11 + $0x20] sm:$0xff] %v931
    %965 = vst [vmem:[#allocation11 + $0x28] sm:$0xff] %v933
    %966 = vst [vmem:[#allocation11 + $0x30] sm:$0xff] %v936
    %967 = vst [vmem:[#allocation11 + $0x38] sm:$0xff] %v938
    %968 = vst [vmem:[#allocation11 + $0x40] sm:$0xff] %v941
    %969 = vst [vmem:[#allocation11 + $0x48] sm:$0xff] %v943
    %970 = vst [vmem:[#allocation11 + $0x50] sm:$0xff] %v946
    %971 = vst [vmem:[#allocation11 + $0x58] sm:$0xff] %v948
    %972 = vst [vmem:[#allocation11 + $0x60] sm:$0xff] %v951
    %973 = vst [vmem:[#allocation11 + $0x68] sm:$0xff] %v953
    %974 = vst [vmem:[#allocation11 + $0x70] sm:$0xff] %v956
    %975 = vst [vmem:[#allocation11 + $0x78] sm:$0xff] %v958
    // Predicated region
    $region46: #{tpu_custom_call.1} parent=1 // pred_check
      _
    $region47: #{tpu_custom_call.1} parent=1 // pred_check_branch
      %977 = sbr.rel (0) target = $region49
    $region48: #{tpu_custom_call.1} parent=1 // pred_region
      %979 = vsyncadd [#allocation5], 0
      %s980 = sshll.u32 [#allocation11], 4
      %s981 = int_to_ptr.vmem [resolvable:$true] %s980
      %s982 = sshll.u32 %s7, 4
      %s983 = int_to_ptr.hbm [resolvable:$true] %s982
      %988 = dma.vmem_to_hbm [thread:$0]  %s981, 2048, %s983, [#allocation5], 128, 128, 8
    $region49: #{tpu_custom_call.1} parent=1 // pred_fallthru
      _
    // Predicated region
    $region50: #{tpu_custom_call.1} parent=1 // pred_check
      _
    $region51: #{tpu_custom_call.1} parent=1 // pred_check_branch
      %990 = sbr.rel (0) target = $region53
    $region52: #{tpu_custom_call.1} parent=1 // pred_region
      %992 = dma.done [#allocation5], 2048
    $region53: #{tpu_custom_call.1} parent=1 // pred_fallthru
      _
    %993 = vsyncpa [#allocation4], 1
    %994 = vsyncpa [#allocation7], 1
    %995 = vsyncpa [#allocation10], 1
    %996 = vsyncpa [#allocation5], 1

</llo_original>
